<compile_context>
chip_gen: v7x
topology: tpu7x:2x2x1
jax: 0.10.0
libtpu: 0.0.40
codegen_flags: <defaults>
</compile_context>

<pallas_src>
import functools

import jax
import jax.numpy as jnp
import numpy as np
from jax.experimental import pallas as pl
from jax.experimental.pallas import tpu as pltpu


def _lstm_kernel(x_ref, h0_ref, c0_ref, wx_ref, wh_ref, b_ref,
                 act_scale_ref, act_shift_ref, wfc_ref, bfc_ref,
                 pred_ref, hout_ref, cout_ref,
                 *, seq_len, batch_p, hidden):
    S, B, Hd = seq_len, batch_p, hidden

    # Hoisted input projection (+ fused pre-scaled bias) for ALL timesteps:
    # one MXU matmul, f32 accumulation regardless of operand dtype.
    xproj = (jnp.dot(x_ref[...], wx_ref[...], preferred_element_type=jnp.float32)
             + b_ref[...])                                   # (S*B, 4*Hd) f32

    wh = wh_ref[...]                    # recurrent weights loaded once
    mm_dtype = wh.dtype                 # f32 or bf16 (MXU operand dtype)
    act_scale = act_scale_ref[...]      # (1, 4*Hd): [.5,.5,.5,1] per gate block
    act_shift = act_shift_ref[...]      # (1, 4*Hd): [.5,.5,.5,0] per gate block

    h = h0_ref[...]                     # (B, Hd) f32 carry
    c = c0_ref[...]                     # (B, Hd) f32 carry
    h_mm = h.astype(mm_dtype)           # off-critical-path cast for step 0

    hs = []
    # Statically unrolled recurrence: full scheduler visibility so step t+1's
    # matmul overlaps step t's elementwise/EUP tail.
    for t in range(S):
        gates = xproj[t * B:(t + 1) * B, :] + jnp.dot(
            h_mm, wh, preferred_element_type=jnp.float32)    # (B, 4*Hd) f32

        # Single full-vreg tanh; i/f/o weight columns were pre-scaled by 0.5, so
        # act*scale+shift == [sigmoid(zi), sigmoid(zf), sigmoid(zo), tanh(zc)].
        act = jnp.tanh(gates) * act_scale + act_shift
        i_t = act[:, 0 * Hd:1 * Hd]
        f_t = act[:, 1 * Hd:2 * Hd]
        o_t = act[:, 2 * Hd:3 * Hd]
        c_tilde = act[:, 3 * Hd:4 * Hd]

        c = f_t * c + i_t * c_tilde
        h = o_t * jnp.tanh(c)
        h_mm = h.astype(mm_dtype)       # cast here so it hides under this step's tail
        hs.append(h)

    # Final recurrent state written once (not per step).
    hout_ref[...] = h
    cout_ref[...] = c

    # Hidden states stay in vregs (no scratch round trip); one batched fc matmul.
    hs_all = jnp.concatenate(hs, axis=0)                     # (S*B, Hd) f32
    pred_ref[...] = (jnp.dot(hs_all, wfc_ref[...],
                             preferred_element_type=jnp.float32)
                     + bfc_ref[...])


def custom_lstm_forward(inputs, H0, C0, params, *, matmul_dtype=jnp.float32):
    """inputs: (B, S, D) f32. Returns (pred (B,S,1), (H (B,Hd), C (B,Hd)))."""
    B, S, D = inputs.shape
    Hd = H0.shape[1]
    (wxi, whi, bi, wxf, whf, bf, wxo, who, bo, wxc, whc, bc, wfc, bfc) = params

    # Fuse the four gate weight sets: 2 matmuls/step instead of 8, lane-dense 4*Hd.
    wx = jnp.concatenate([wxi, wxf, wxo, wxc], axis=1)       # (D, 4*Hd)
    wh = jnp.concatenate([whi, whf, who, whc], axis=1)       # (Hd, 4*Hd)
    b = jnp.concatenate([bi, bf, bo, bc], axis=1)            # (1, 4*Hd)

    # Pre-scale i/f/o columns by 0.5: sigmoid(z) = 0.5*tanh(0.5*z) + 0.5 becomes a
    # single full-width in-kernel tanh + one per-lane affine fixup.
    col_scale = jnp.concatenate([jnp.full((1, 3 * Hd), 0.5, jnp.float32),
                                 jnp.ones((1, Hd), jnp.float32)], axis=1)
    wx = wx * col_scale
    wh = wh * col_scale
    b = b * col_scale                                        # stays f32 (acc dtype)
    act_scale = col_scale                                    # [.5,.5,.5,1]
    act_shift = jnp.concatenate([jnp.full((1, 3 * Hd), 0.5, jnp.float32),
                                 jnp.zeros((1, Hd), jnp.float32)], axis=1)

    # Pad batch to the f32 sublane count (8): every per-step tile is sublane-aligned
    # (gates = exactly one (8,128) f32 vreg).  Padded rows are sliced off below.
    Bp = ((B + 7) // 8) * 8
    pad = Bp - B
    x_tm = jnp.transpose(inputs, (1, 0, 2))                  # (S, B, D) time-major
    if pad:
        x_tm = jnp.pad(x_tm, ((0, 0), (0, pad), (0, 0)))
        H0p = jnp.pad(H0, ((0, pad), (0, 0)))
        C0p = jnp.pad(C0, ((0, pad), (0, 0)))
    else:
        H0p, C0p = H0, C0
    x2d = x_tm.reshape(S * Bp, D)

    # Optional bf16 MXU operands (valid on v5e/v6e/v7x); gate math / carries stay f32.
    x2d = x2d.astype(matmul_dtype)
    wx = wx.astype(matmul_dtype)
    wh = wh.astype(matmul_dtype)

    kernel = functools.partial(_lstm_kernel, seq_len=S, batch_p=Bp, hidden=Hd)
    vmem = pl.BlockSpec(memory_space=pltpu.MemorySpace.VMEM)

    pred_flat, h_fin, c_fin = pl.pallas_call(
        kernel,
        out_shape=(
            jax.ShapeDtypeStruct((S * Bp, 1), jnp.float32),  # pred (time-major, flat)
            jax.ShapeDtypeStruct((Bp, Hd), jnp.float32),     # final H (padded)
            jax.ShapeDtypeStruct((Bp, Hd), jnp.float32),     # final C (padded)
        ),
        in_specs=[vmem] * 10,
        out_specs=(vmem, vmem, vmem),
    )(x2d, H0p, C0p, wx, wh, b, act_scale, act_shift, wfc, bfc)

    pred = jnp.transpose(pred_flat.reshape(S, Bp, 1)[:, :B, :], (1, 0, 2))  # (B, S, 1)
    return pred, (h_fin[:B], c_fin[:B])


def reference_forward(inputs, H0, C0, params):
    """Pure-JAX reference mirroring the PyTorch module, for verification."""
    (wxi, whi, bi, wxf, whf, bf, wxo, who, bo, wxc, whc, bc, wfc, bfc) = params
    B, S, D = inputs.shape
    H, C = H0, C0
    hs = []
    for t in range(S):
        x_t = inputs[:, t, :]
        i_t = jax.nn.sigmoid(x_t @ wxi + H @ whi + bi)
        f_t = jax.nn.sigmoid(x_t @ wxf + H @ whf + bf)
        o_t = jax.nn.sigmoid(x_t @ wxo + H @ who + bo)
        c_tilde = jnp.tanh(x_t @ wxc + H @ whc + bc)
        C = f_t * C + i_t * c_tilde
        H = o_t * jnp.tanh(C)
        hs.append(H[:, None, :])
    outputs = jnp.concatenate(hs, axis=1)     # (B, S, Hd)
    pred = outputs @ wfc + bfc                # (B, S, 1)
    return pred, (H, C)


if __name__ == "__main__":
    # Small shapes consistent with the module's forward.
    B, S, D, Hd = 2, 8, 4, 32

    key = jax.random.PRNGKey(0)
    keys = jax.random.split(key, 16)

    def gate_params(k1, k2):
        return (jax.random.normal(k1, (D, Hd), jnp.float32),
                jax.random.normal(k2, (Hd, Hd), jnp.float32),
                jnp.zeros((1, Hd), jnp.float32))

    wxi, whi, bi = gate_params(keys[0], keys[1])
    wxf, whf, bf = gate_params(keys[2], keys[3])
    wxo, who, bo = gate_params(keys[4], keys[5])
    wxc, whc, bc = gate_params(keys[6], keys[7])
    # nn.Linear(hidden_units, 1): weight (1, Hd), bias (1,). Stored transposed.
    wfc = jax.random.normal(keys[8], (Hd, 1), jnp.float32) * (1.0 / np.sqrt(Hd))
    bfc = jnp.zeros((1, 1), jnp.float32)
    params = (wxi, whi, bi, wxf, whf, bf, wxo, who, bo, wxc, whc, bc, wfc, bfc)

    inputs = jax.random.normal(keys[9], (B, S, D), jnp.float32)
    # The PyTorch module draws H, C ~ randn when H_C is None; we draw them
    # deterministically here and pass them explicitly (same semantics).
    H0 = jax.random.normal(keys[10], (B, Hd), jnp.float32)
    C0 = jax.random.normal(keys[11], (B, Hd), jnp.float32)

    pred_ref, (H_ref, C_ref) = reference_forward(inputs, H0, C0, params)

    # --- f32 MXU operands (exact-path check, matches PyTorch numerics) ---
    pred, (H_fin, C_fin) = custom_lstm_forward(inputs, H0, C0, params)
    jax.block_until_ready((pred, H_fin, C_fin))
    np.testing.assert_allclose(np.asarray(pred), np.asarray(pred_ref), rtol=2e-3, atol=2e-3)
    np.testing.assert_allclose(np.asarray(H_fin), np.asarray(H_ref), rtol=2e-3, atol=2e-3)
    np.testing.assert_allclose(np.asarray(C_fin), np.asarray(C_ref), rtol=2e-3, atol=2e-3)
    assert pred.shape == (B, S, 1) and H_fin.shape == (B, Hd) and C_fin.shape == (B, Hd)

    # --- bf16 MXU operands (v5e/v6e/v7x fast path); f32 gate math / carry in-kernel.
    # Note: bf16 recurrent-operand quantization compounds over timesteps; keep the
    # f32 path for long sequences or accuracy-sensitive use.
    pred_bf, (H_bf, C_bf) = custom_lstm_forward(inputs, H0, C0, params,
                                                matmul_dtype=jnp.bfloat16)
    jax.block_until_ready((pred_bf, H_bf, C_bf))
    np.testing.assert_allclose(np.asarray(pred_bf), np.asarray(pred_ref), rtol=0.0, atol=0.2)
    np.testing.assert_allclose(np.asarray(H_bf), np.asarray(H_ref), rtol=0.0, atol=0.2)
    np.testing.assert_allclose(np.asarray(C_bf), np.asarray(C_ref), rtol=0.0, atol=0.2)

    print("KERNEL_OK")
</pallas_src>

<mosaic_0001>
module attributes {stable_mosaic.version = 11 : i64} {
  func.func @_lstm_kernel(%arg0: memref<64x4xf32, #tpu.memory_space<vmem>>, %arg1: memref<8x32xf32, #tpu.memory_space<vmem>>, %arg2: memref<8x32xf32, #tpu.memory_space<vmem>>, %arg3: memref<4x128xf32, #tpu.memory_space<vmem>>, %arg4: memref<32x128xf32, #tpu.memory_space<vmem>>, %arg5: memref<1x128xf32, #tpu.memory_space<vmem>>, %arg6: memref<1x128xf32, #tpu.memory_space<vmem>>, %arg7: memref<1x128xf32, #tpu.memory_space<vmem>>, %arg8: memref<32x1xf32, #tpu.memory_space<vmem>>, %arg9: memref<1x1xf32, #tpu.memory_space<vmem>>, %arg10: memref<64x1xf32, #tpu.memory_space<vmem>>, %arg11: memref<8x32xf32, #tpu.memory_space<vmem>>, %arg12: memref<8x32xf32, #tpu.memory_space<vmem>>) attributes {dimension_semantics = [], scalar_prefetch = 0 : i64, scratch_operands = 0 : i64, tpu.core_type = #tpu.core_type<tc>} {
    %c0 = arith.constant 0 : index
    %c0_0 = arith.constant 0 : index
    %0 = vector.load %arg0[%c0, %c0_0] : memref<64x4xf32, #tpu.memory_space<vmem>>, vector<64x4xf32>
    %c0_1 = arith.constant 0 : index
    %c0_2 = arith.constant 0 : index
    %1 = vector.load %arg3[%c0_1, %c0_2] : memref<4x128xf32, #tpu.memory_space<vmem>>, vector<4x128xf32>
    %cst = arith.constant dense<0.000000e+00> : vector<64x128xf32>
    %2 = tpu.matmul %0, %1, %cst {dimension_numbers = #tpu.dot_dimension_numbers<[1], [0], [0], [1], [0, 0, 1, 1], [], []>} : vector<64x4xf32>, vector<4x128xf32>, vector<64x128xf32> -> vector<64x128xf32>
    %c0_3 = arith.constant 0 : index
    %c0_4 = arith.constant 0 : index
    %3 = vector.load %arg5[%c0_3, %c0_4] : memref<1x128xf32, #tpu.memory_space<vmem>>, vector<1x128xf32>
    %4 = vector.broadcast %3 : vector<1x128xf32> to vector<64x128xf32>
    %5 = arith.addf %2, %4 : vector<64x128xf32>
    %c0_5 = arith.constant 0 : index
    %c0_6 = arith.constant 0 : index
    %6 = vector.load %arg4[%c0_5, %c0_6] : memref<32x128xf32, #tpu.memory_space<vmem>>, vector<32x128xf32>
    %c0_7 = arith.constant 0 : index
    %c0_8 = arith.constant 0 : index
    %7 = vector.load %arg6[%c0_7, %c0_8] : memref<1x128xf32, #tpu.memory_space<vmem>>, vector<1x128xf32>
    %c0_9 = arith.constant 0 : index
    %c0_10 = arith.constant 0 : index
    %8 = vector.load %arg7[%c0_9, %c0_10] : memref<1x128xf32, #tpu.memory_space<vmem>>, vector<1x128xf32>
    %c0_11 = arith.constant 0 : index
    %c0_12 = arith.constant 0 : index
    %9 = vector.load %arg1[%c0_11, %c0_12] : memref<8x32xf32, #tpu.memory_space<vmem>>, vector<8x32xf32>
    %c0_13 = arith.constant 0 : index
    %c0_14 = arith.constant 0 : index
    %10 = vector.load %arg2[%c0_13, %c0_14] : memref<8x32xf32, #tpu.memory_space<vmem>>, vector<8x32xf32>
    %11 = vector.extract_strided_slice %5 {offsets = [0, 0], sizes = [8, 128], strides = [1, 1]} : vector<64x128xf32> to vector<8x128xf32>
    %cst_15 = arith.constant dense<0.000000e+00> : vector<8x128xf32>
    %12 = tpu.matmul %9, %6, %cst_15 {dimension_numbers = #tpu.dot_dimension_numbers<[1], [0], [0], [1], [0, 0, 1, 1], [], []>} : vector<8x32xf32>, vector<32x128xf32>, vector<8x128xf32> -> vector<8x128xf32>
    %13 = arith.addf %11, %12 : vector<8x128xf32>
    %14 = math.tanh %13 : vector<8x128xf32>
    %15 = vector.broadcast %7 : vector<1x128xf32> to vector<8x128xf32>
    %16 = arith.mulf %14, %15 : vector<8x128xf32>
    %17 = vector.broadcast %8 : vector<1x128xf32> to vector<8x128xf32>
    %18 = arith.addf %16, %17 : vector<8x128xf32>
    %19 = vector.extract_strided_slice %18 {offsets = [0, 0], sizes = [8, 32], strides = [1, 1]} : vector<8x128xf32> to vector<8x32xf32>
    %20 = vector.extract_strided_slice %18 {offsets = [0, 32], sizes = [8, 32], strides = [1, 1]} : vector<8x128xf32> to vector<8x32xf32>
    %21 = vector.extract_strided_slice %18 {offsets = [0, 64], sizes = [8, 32], strides = [1, 1]} : vector<8x128xf32> to vector<8x32xf32>
    %22 = vector.extract_strided_slice %18 {offsets = [0, 96], sizes = [8, 32], strides = [1, 1]} : vector<8x128xf32> to vector<8x32xf32>
    %23 = arith.mulf %20, %10 : vector<8x32xf32>
    %24 = arith.mulf %19, %22 : vector<8x32xf32>
    %25 = arith.addf %23, %24 : vector<8x32xf32>
    %26 = math.tanh %25 : vector<8x32xf32>
    %27 = arith.mulf %21, %26 : vector<8x32xf32>
    %28 = vector.extract_strided_slice %5 {offsets = [8, 0], sizes = [8, 128], strides = [1, 1]} : vector<64x128xf32> to vector<8x128xf32>
    %cst_16 = arith.constant dense<0.000000e+00> : vector<8x128xf32>
    %29 = tpu.matmul %27, %6, %cst_16 {dimension_numbers = #tpu.dot_dimension_numbers<[1], [0], [0], [1], [0, 0, 1, 1], [], []>} : vector<8x32xf32>, vector<32x128xf32>, vector<8x128xf32> -> vector<8x128xf32>
    %30 = arith.addf %28, %29 : vector<8x128xf32>
    %31 = math.tanh %30 : vector<8x128xf32>
    %32 = vector.broadcast %7 : vector<1x128xf32> to vector<8x128xf32>
    %33 = arith.mulf %31, %32 : vector<8x128xf32>
    %34 = vector.broadcast %8 : vector<1x128xf32> to vector<8x128xf32>
    %35 = arith.addf %33, %34 : vector<8x128xf32>
    %36 = vector.extract_strided_slice %35 {offsets = [0, 0], sizes = [8, 32], strides = [1, 1]} : vector<8x128xf32> to vector<8x32xf32>
    %37 = vector.extract_strided_slice %35 {offsets = [0, 32], sizes = [8, 32], strides = [1, 1]} : vector<8x128xf32> to vector<8x32xf32>
    %38 = vector.extract_strided_slice %35 {offsets = [0, 64], sizes = [8, 32], strides = [1, 1]} : vector<8x128xf32> to vector<8x32xf32>
    %39 = vector.extract_strided_slice %35 {offsets = [0, 96], sizes = [8, 32], strides = [1, 1]} : vector<8x128xf32> to vector<8x32xf32>
    %40 = arith.mulf %37, %25 : vector<8x32xf32>
    %41 = arith.mulf %36, %39 : vector<8x32xf32>
    %42 = arith.addf %40, %41 : vector<8x32xf32>
    %43 = math.tanh %42 : vector<8x32xf32>
    %44 = arith.mulf %38, %43 : vector<8x32xf32>
    %45 = vector.extract_strided_slice %5 {offsets = [16, 0], sizes = [8, 128], strides = [1, 1]} : vector<64x128xf32> to vector<8x128xf32>
    %cst_17 = arith.constant dense<0.000000e+00> : vector<8x128xf32>
    %46 = tpu.matmul %44, %6, %cst_17 {dimension_numbers = #tpu.dot_dimension_numbers<[1], [0], [0], [1], [0, 0, 1, 1], [], []>} : vector<8x32xf32>, vector<32x128xf32>, vector<8x128xf32> -> vector<8x128xf32>
    %47 = arith.addf %45, %46 : vector<8x128xf32>
    %48 = math.tanh %47 : vector<8x128xf32>
    %49 = vector.broadcast %7 : vector<1x128xf32> to vector<8x128xf32>
    %50 = arith.mulf %48, %49 : vector<8x128xf32>
    %51 = vector.broadcast %8 : vector<1x128xf32> to vector<8x128xf32>
    %52 = arith.addf %50, %51 : vector<8x128xf32>
    %53 = vector.extract_strided_slice %52 {offsets = [0, 0], sizes = [8, 32], strides = [1, 1]} : vector<8x128xf32> to vector<8x32xf32>
    %54 = vector.extract_strided_slice %52 {offsets = [0, 32], sizes = [8, 32], strides = [1, 1]} : vector<8x128xf32> to vector<8x32xf32>
    %55 = vector.extract_strided_slice %52 {offsets = [0, 64], sizes = [8, 32], strides = [1, 1]} : vector<8x128xf32> to vector<8x32xf32>
    %56 = vector.extract_strided_slice %52 {offsets = [0, 96], sizes = [8, 32], strides = [1, 1]} : vector<8x128xf32> to vector<8x32xf32>
    %57 = arith.mulf %54, %42 : vector<8x32xf32>
    %58 = arith.mulf %53, %56 : vector<8x32xf32>
    %59 = arith.addf %57, %58 : vector<8x32xf32>
    %60 = math.tanh %59 : vector<8x32xf32>
    %61 = arith.mulf %55, %60 : vector<8x32xf32>
    %62 = vector.extract_strided_slice %5 {offsets = [24, 0], sizes = [8, 128], strides = [1, 1]} : vector<64x128xf32> to vector<8x128xf32>
    %cst_18 = arith.constant dense<0.000000e+00> : vector<8x128xf32>
    %63 = tpu.matmul %61, %6, %cst_18 {dimension_numbers = #tpu.dot_dimension_numbers<[1], [0], [0], [1], [0, 0, 1, 1], [], []>} : vector<8x32xf32>, vector<32x128xf32>, vector<8x128xf32> -> vector<8x128xf32>
    %64 = arith.addf %62, %63 : vector<8x128xf32>
    %65 = math.tanh %64 : vector<8x128xf32>
    %66 = vector.broadcast %7 : vector<1x128xf32> to vector<8x128xf32>
    %67 = arith.mulf %65, %66 : vector<8x128xf32>
    %68 = vector.broadcast %8 : vector<1x128xf32> to vector<8x128xf32>
    %69 = arith.addf %67, %68 : vector<8x128xf32>
    %70 = vector.extract_strided_slice %69 {offsets = [0, 0], sizes = [8, 32], strides = [1, 1]} : vector<8x128xf32> to vector<8x32xf32>
    %71 = vector.extract_strided_slice %69 {offsets = [0, 32], sizes = [8, 32], strides = [1, 1]} : vector<8x128xf32> to vector<8x32xf32>
    %72 = vector.extract_strided_slice %69 {offsets = [0, 64], sizes = [8, 32], strides = [1, 1]} : vector<8x128xf32> to vector<8x32xf32>
    %73 = vector.extract_strided_slice %69 {offsets = [0, 96], sizes = [8, 32], strides = [1, 1]} : vector<8x128xf32> to vector<8x32xf32>
    %74 = arith.mulf %71, %59 : vector<8x32xf32>
    %75 = arith.mulf %70, %73 : vector<8x32xf32>
    %76 = arith.addf %74, %75 : vector<8x32xf32>
    %77 = math.tanh %76 : vector<8x32xf32>
    %78 = arith.mulf %72, %77 : vector<8x32xf32>
    %79 = vector.extract_strided_slice %5 {offsets = [32, 0], sizes = [8, 128], strides = [1, 1]} : vector<64x128xf32> to vector<8x128xf32>
    %cst_19 = arith.constant dense<0.000000e+00> : vector<8x128xf32>
    %80 = tpu.matmul %78, %6, %cst_19 {dimension_numbers = #tpu.dot_dimension_numbers<[1], [0], [0], [1], [0, 0, 1, 1], [], []>} : vector<8x32xf32>, vector<32x128xf32>, vector<8x128xf32> -> vector<8x128xf32>
    %81 = arith.addf %79, %80 : vector<8x128xf32>
    %82 = math.tanh %81 : vector<8x128xf32>
    %83 = vector.broadcast %7 : vector<1x128xf32> to vector<8x128xf32>
    %84 = arith.mulf %82, %83 : vector<8x128xf32>
    %85 = vector.broadcast %8 : vector<1x128xf32> to vector<8x128xf32>
    %86 = arith.addf %84, %85 : vector<8x128xf32>
    %87 = vector.extract_strided_slice %86 {offsets = [0, 0], sizes = [8, 32], strides = [1, 1]} : vector<8x128xf32> to vector<8x32xf32>
    %88 = vector.extract_strided_slice %86 {offsets = [0, 32], sizes = [8, 32], strides = [1, 1]} : vector<8x128xf32> to vector<8x32xf32>
    %89 = vector.extract_strided_slice %86 {offsets = [0, 64], sizes = [8, 32], strides = [1, 1]} : vector<8x128xf32> to vector<8x32xf32>
    %90 = vector.extract_strided_slice %86 {offsets = [0, 96], sizes = [8, 32], strides = [1, 1]} : vector<8x128xf32> to vector<8x32xf32>
    %91 = arith.mulf %88, %76 : vector<8x32xf32>
    %92 = arith.mulf %87, %90 : vector<8x32xf32>
    %93 = arith.addf %91, %92 : vector<8x32xf32>
    %94 = math.tanh %93 : vector<8x32xf32>
    %95 = arith.mulf %89, %94 : vector<8x32xf32>
    %96 = vector.extract_strided_slice %5 {offsets = [40, 0], sizes = [8, 128], strides = [1, 1]} : vector<64x128xf32> to vector<8x128xf32>
    %cst_20 = arith.constant dense<0.000000e+00> : vector<8x128xf32>
    %97 = tpu.matmul %95, %6, %cst_20 {dimension_numbers = #tpu.dot_dimension_numbers<[1], [0], [0], [1], [0, 0, 1, 1], [], []>} : vector<8x32xf32>, vector<32x128xf32>, vector<8x128xf32> -> vector<8x128xf32>
    %98 = arith.addf %96, %97 : vector<8x128xf32>
    %99 = math.tanh %98 : vector<8x128xf32>
    %100 = vector.broadcast %7 : vector<1x128xf32> to vector<8x128xf32>
    %101 = arith.mulf %99, %100 : vector<8x128xf32>
    %102 = vector.broadcast %8 : vector<1x128xf32> to vector<8x128xf32>
    %103 = arith.addf %101, %102 : vector<8x128xf32>
    %104 = vector.extract_strided_slice %103 {offsets = [0, 0], sizes = [8, 32], strides = [1, 1]} : vector<8x128xf32> to vector<8x32xf32>
    %105 = vector.extract_strided_slice %103 {offsets = [0, 32], sizes = [8, 32], strides = [1, 1]} : vector<8x128xf32> to vector<8x32xf32>
    %106 = vector.extract_strided_slice %103 {offsets = [0, 64], sizes = [8, 32], strides = [1, 1]} : vector<8x128xf32> to vector<8x32xf32>
    %107 = vector.extract_strided_slice %103 {offsets = [0, 96], sizes = [8, 32], strides = [1, 1]} : vector<8x128xf32> to vector<8x32xf32>
    %108 = arith.mulf %105, %93 : vector<8x32xf32>
    %109 = arith.mulf %104, %107 : vector<8x32xf32>
    %110 = arith.addf %108, %109 : vector<8x32xf32>
    %111 = math.tanh %110 : vector<8x32xf32>
    %112 = arith.mulf %106, %111 : vector<8x32xf32>
    %113 = vector.extract_strided_slice %5 {offsets = [48, 0], sizes = [8, 128], strides = [1, 1]} : vector<64x128xf32> to vector<8x128xf32>
    %cst_21 = arith.constant dense<0.000000e+00> : vector<8x128xf32>
    %114 = tpu.matmul %112, %6, %cst_21 {dimension_numbers = #tpu.dot_dimension_numbers<[1], [0], [0], [1], [0, 0, 1, 1], [], []>} : vector<8x32xf32>, vector<32x128xf32>, vector<8x128xf32> -> vector<8x128xf32>
    %115 = arith.addf %113, %114 : vector<8x128xf32>
    %116 = math.tanh %115 : vector<8x128xf32>
    %117 = vector.broadcast %7 : vector<1x128xf32> to vector<8x128xf32>
    %118 = arith.mulf %116, %117 : vector<8x128xf32>
    %119 = vector.broadcast %8 : vector<1x128xf32> to vector<8x128xf32>
    %120 = arith.addf %118, %119 : vector<8x128xf32>
    %121 = vector.extract_strided_slice %120 {offsets = [0, 0], sizes = [8, 32], strides = [1, 1]} : vector<8x128xf32> to vector<8x32xf32>
    %122 = vector.extract_strided_slice %120 {offsets = [0, 32], sizes = [8, 32], strides = [1, 1]} : vector<8x128xf32> to vector<8x32xf32>
    %123 = vector.extract_strided_slice %120 {offsets = [0, 64], sizes = [8, 32], strides = [1, 1]} : vector<8x128xf32> to vector<8x32xf32>
    %124 = vector.extract_strided_slice %120 {offsets = [0, 96], sizes = [8, 32], strides = [1, 1]} : vector<8x128xf32> to vector<8x32xf32>
    %125 = arith.mulf %122, %110 : vector<8x32xf32>
    %126 = arith.mulf %121, %124 : vector<8x32xf32>
    %127 = arith.addf %125, %126 : vector<8x32xf32>
    %128 = math.tanh %127 : vector<8x32xf32>
    %129 = arith.mulf %123, %128 : vector<8x32xf32>
    %130 = vector.extract_strided_slice %5 {offsets = [56, 0], sizes = [8, 128], strides = [1, 1]} : vector<64x128xf32> to vector<8x128xf32>
    %cst_22 = arith.constant dense<0.000000e+00> : vector<8x128xf32>
    %131 = tpu.matmul %129, %6, %cst_22 {dimension_numbers = #tpu.dot_dimension_numbers<[1], [0], [0], [1], [0, 0, 1, 1], [], []>} : vector<8x32xf32>, vector<32x128xf32>, vector<8x128xf32> -> vector<8x128xf32>
    %132 = arith.addf %130, %131 : vector<8x128xf32>
    %133 = math.tanh %132 : vector<8x128xf32>
    %134 = vector.broadcast %7 : vector<1x128xf32> to vector<8x128xf32>
    %135 = arith.mulf %133, %134 : vector<8x128xf32>
    %136 = vector.broadcast %8 : vector<1x128xf32> to vector<8x128xf32>
    %137 = arith.addf %135, %136 : vector<8x128xf32>
    %138 = vector.extract_strided_slice %137 {offsets = [0, 0], sizes = [8, 32], strides = [1, 1]} : vector<8x128xf32> to vector<8x32xf32>
    %139 = vector.extract_strided_slice %137 {offsets = [0, 32], sizes = [8, 32], strides = [1, 1]} : vector<8x128xf32> to vector<8x32xf32>
    %140 = vector.extract_strided_slice %137 {offsets = [0, 64], sizes = [8, 32], strides = [1, 1]} : vector<8x128xf32> to vector<8x32xf32>
    %141 = vector.extract_strided_slice %137 {offsets = [0, 96], sizes = [8, 32], strides = [1, 1]} : vector<8x128xf32> to vector<8x32xf32>
    %142 = arith.mulf %139, %127 : vector<8x32xf32>
    %143 = arith.mulf %138, %141 : vector<8x32xf32>
    %144 = arith.addf %142, %143 : vector<8x32xf32>
    %145 = math.tanh %144 : vector<8x32xf32>
    %146 = arith.mulf %140, %145 : vector<8x32xf32>
    %c0_23 = arith.constant 0 : index
    %c0_24 = arith.constant 0 : index
    %147 = vector.load %arg11[%c0_23, %c0_24] : memref<8x32xf32, #tpu.memory_space<vmem>>, vector<8x32xf32>
    tpu.vector_store %arg11[%c0_23, %c0_24], %146 {strides = array<i32>} : memref<8x32xf32, #tpu.memory_space<vmem>>, vector<8x32xf32>,
    %c0_25 = arith.constant 0 : index
    %c0_26 = arith.constant 0 : index
    %148 = vector.load %arg12[%c0_25, %c0_26] : memref<8x32xf32, #tpu.memory_space<vmem>>, vector<8x32xf32>
    tpu.vector_store %arg12[%c0_25, %c0_26], %144 {strides = array<i32>} : memref<8x32xf32, #tpu.memory_space<vmem>>, vector<8x32xf32>,
    %149 = tpu.concatenate %27, %44, %61, %78, %95, %112, %129, %146 in 0 : vector<8x32xf32>, vector<8x32xf32>, vector<8x32xf32>, vector<8x32xf32>, vector<8x32xf32>, vector<8x32xf32>, vector<8x32xf32>, vector<8x32xf32> -> vector<64x32xf32>
    %c0_27 = arith.constant 0 : index
    %c0_28 = arith.constant 0 : index
    %150 = vector.load %arg8[%c0_27, %c0_28] : memref<32x1xf32, #tpu.memory_space<vmem>>, vector<32x1xf32>
    %cst_29 = arith.constant dense<0.000000e+00> : vector<64x1xf32>
    %151 = tpu.matmul %149, %150, %cst_29 {dimension_numbers = #tpu.dot_dimension_numbers<[1], [0], [0], [1], [0, 0, 1, 1], [], []>} : vector<64x32xf32>, vector<32x1xf32>, vector<64x1xf32> -> vector<64x1xf32>
    %c0_30 = arith.constant 0 : index
    %c0_31 = arith.constant 0 : index
    %152 = vector.load %arg9[%c0_30, %c0_31] : memref<1x1xf32, #tpu.memory_space<vmem>>, vector<1x1xf32>
    %153 = vector.broadcast %152 : vector<1x1xf32> to vector<64x1xf32>
    %154 = arith.addf %151, %153 : vector<64x1xf32>
    %c0_32 = arith.constant 0 : index
    %c0_33 = arith.constant 0 : index
    %155 = vector.load %arg10[%c0_32, %c0_33] : memref<64x1xf32, #tpu.memory_space<vmem>>, vector<64x1xf32>
    tpu.vector_store %arg10[%c0_32, %c0_33], %154 {strides = array<i32>} : memref<64x1xf32, #tpu.memory_space<vmem>>, vector<64x1xf32>,
    return
  }
}

</mosaic_0001>

<llo_original>
// kernel: tpu_custom_call.1
$region0: #{tpu_custom_call.1}
  #allocation0 [shape = 'u32[]', space=smem, size = 0x4, offset = 0x4, fixed_abs, tag = 'smem constant byte address 0x4 - core index']
  #allocation1 [shape = 'u32[144,128]{1,0:T(1,128)}', space=vmem, size = 0x12000, scoped, tag = 'internal scratch']
  #allocation2 [shape = 'f32[1,1]{1,0:T(1,128)S(1)}', space=vmem, size = 0x200, scoped, tag = 'scoped memory for tpu_custom_call.1']
  %s0 = inlined_call_operand.vmem [shape: f32[64,4], index: 0, kind: input, shape index: {}]
  %s1 = inlined_call_operand.vmem [shape: f32[8,32], index: 1, kind: input, shape index: {}]
  %s2 = inlined_call_operand.vmem [shape: f32[8,32], index: 2, kind: input, shape index: {}]
  %s3 = inlined_call_operand.vmem [shape: f32[4,128], index: 3, kind: input, shape index: {}]
  %s4 = inlined_call_operand.vmem [shape: f32[32,128], index: 4, kind: input, shape index: {}]
  %s5 = inlined_call_operand.vmem [shape: f32[1,128], index: 5, kind: input, shape index: {}]
  %s6 = inlined_call_operand.vmem [shape: f32[1,128], index: 6, kind: input, shape index: {}]
  %s7 = inlined_call_operand.vmem [shape: f32[1,128], index: 7, kind: input, shape index: {}]
  %s8 = inlined_call_operand.vmem [shape: f32[32,1], index: 8, kind: input, shape index: {}]
  %s9 = inlined_call_operand.<no memory space> [shape: f32[1,1], index: 9, kind: input, shape index: {}]
  %s10 = inlined_call_operand.vmem [shape: f32[64,1], index: 10, kind: output, shape index: {0}]
  %s11 = inlined_call_operand.hbm [shape: f32[8,32], index: 11, kind: output, shape index: {1}]
  %s12 = inlined_call_operand.hbm [shape: f32[8,32], index: 12, kind: output, shape index: {2}]
  %13 = xla_tuple %s10, %s11, %s12
  %s14 = sld [smem:[#allocation0]]
  $region66: #{tpu_custom_call.1} parent=0
    _
  %s16 = ssub.s32 1, %s14
  %s17 = scalar_select 0, %s16, %s14
  %v18 = vstv %s9
  %19 = vst [vmem:[#allocation2] sm:$0x1] %v18
  $region1: #{tpu_custom_call.1} parent=0
    #allocation3 [shape = 'u8[4096]{0}', space=vmem, size = 0x1000, scoped, tag = 'output window, operand 1, single buffered']
    #allocation4 [shape = 's32[1]{0}', space=sflag, size = 0x4, scoped, tag = 'scoped memory for tpu_custom_call.1']
    #allocation5 [shape = 'u8[4096]{0}', space=vmem, size = 0x1000, scoped, tag = 'output window, operand 2, single buffered']
    #allocation6 [shape = 's32[1]{0}', space=sflag, size = 0x4, scoped, tag = 'scoped memory for tpu_custom_call.1']
    %20 = vsyncpa [#allocation4], 0
    %21 = vsyncpa [#allocation6], 0
    // Predicated region
    $region2: #{tpu_custom_call.1} parent=1 // pred_check
      _
    $region3: #{tpu_custom_call.1} parent=1 // pred_check_branch
      %23 = sbr.rel (0) target = $region5
    $region4: #{tpu_custom_call.1} parent=1 // pred_region
      _
    $region5: #{tpu_custom_call.1} parent=1 // pred_fallthru
      _
    // Predicated region
    $region6: #{tpu_custom_call.1} parent=1 // pred_check
      _
    $region7: #{tpu_custom_call.1} parent=1 // pred_check_branch
      %25 = sbr.rel (0) target = $region9
    $region8: #{tpu_custom_call.1} parent=1 // pred_region
      _
    $region9: #{tpu_custom_call.1} parent=1 // pred_fallthru
      _
    // Predicated region
    $region10: #{tpu_custom_call.1} parent=1 // pred_check
      _
    $region11: #{tpu_custom_call.1} parent=1 // pred_check_branch
      %27 = sbr.rel (0) target = $region13
    $region12: #{tpu_custom_call.1} parent=1 // pred_region
      _
    $region13: #{tpu_custom_call.1} parent=1 // pred_fallthru
      _
    // Predicated region
    $region14: #{tpu_custom_call.1} parent=1 // pred_check
      _
    $region15: #{tpu_custom_call.1} parent=1 // pred_check_branch
      %29 = sbr.rel (0) target = $region17
    $region16: #{tpu_custom_call.1} parent=1 // pred_region
      _
    $region17: #{tpu_custom_call.1} parent=1 // pred_fallthru
      _
    // Predicated region
    $region18: #{tpu_custom_call.1} parent=1 // pred_check
      _
    $region19: #{tpu_custom_call.1} parent=1 // pred_check_branch
      %31 = sbr.rel (0) target = $region21
    $region20: #{tpu_custom_call.1} parent=1 // pred_region
      _
    $region21: #{tpu_custom_call.1} parent=1 // pred_fallthru
      _
    // Predicated region
    $region22: #{tpu_custom_call.1} parent=1 // pred_check
      _
    $region23: #{tpu_custom_call.1} parent=1 // pred_check_branch
      %33 = sbr.rel (0) target = $region25
    $region24: #{tpu_custom_call.1} parent=1 // pred_region
      _
    $region25: #{tpu_custom_call.1} parent=1 // pred_fallthru
      _
    // Predicated region
    $region26: #{tpu_custom_call.1} parent=1 // pred_check
      _
    $region27: #{tpu_custom_call.1} parent=1 // pred_check_branch
      %35 = sbr.rel (0) target = $region29
    $region28: #{tpu_custom_call.1} parent=1 // pred_region
      _
    $region29: #{tpu_custom_call.1} parent=1 // pred_fallthru
      _
    // Predicated region
    $region30: #{tpu_custom_call.1} parent=1 // pred_check
      _
    $region31: #{tpu_custom_call.1} parent=1 // pred_check_branch
      %37 = sbr.rel (0) target = $region33
    $region32: #{tpu_custom_call.1} parent=1 // pred_region
      _
    $region33: #{tpu_custom_call.1} parent=1 // pred_fallthru
      _
    // Predicated region
    $region34: #{tpu_custom_call.1} parent=1 // pred_check
      _
    $region35: #{tpu_custom_call.1} parent=1 // pred_check_branch
      %39 = sbr.rel (0) target = $region37
    $region36: #{tpu_custom_call.1} parent=1 // pred_region
      _
    $region37: #{tpu_custom_call.1} parent=1 // pred_fallthru
      _
    // Predicated region
    $region38: #{tpu_custom_call.1} parent=1 // pred_check
      _
    $region39: #{tpu_custom_call.1} parent=1 // pred_check_branch
      %41 = sbr.rel (0) target = $region41
    $region40: #{tpu_custom_call.1} parent=1 // pred_region
      _
    $region41: #{tpu_custom_call.1} parent=1 // pred_fallthru
      _
    %v42 = vld [vmem:[%s0] sm:$0xff]
    %v43 = vld [vmem:[%s0 + $0x8] sm:$0xff]
    %v44 = vld [vmem:[%s0 + $0x10] sm:$0xff]
    %v45 = vld [vmem:[%s0 + $0x18] sm:$0xff]
    %v46 = vld [vmem:[%s0 + $0x20] sm:$0xff]
    %v47 = vld [vmem:[%s0 + $0x28] sm:$0xff]
    %v48 = vld [vmem:[%s0 + $0x30] sm:$0xff]
    %v49 = vld [vmem:[%s0 + $0x38] sm:$0xff]
    %v50 = vld [vmem:[%s3] sm:$0xf]
    %v51 = vld [vmem:[%s5] sm:$0x1]
    %v53 = vlaneseq
    %v54 = vshrl.u32 %v53, 7
    %v55 = vsub.s32 0, %v54
    %v56 = vrot.slane %v51, %v55
    %vm58 = vcmask 31744
    %v60 = vsel %vm58, %v42, 0
    %v63 = vsel %vm58, %v43, 0
    %v66 = vsel %vm58, %v44, 0
    %v69 = vsel %vm58, %v45, 0
    %v72 = vsel %vm58, %v46, 0
    %v75 = vsel %vm58, %v47, 0
    %v78 = vsel %vm58, %v48, 0
    %v81 = vsel %vm58, %v49, 0
    %vm83 = vcmask 1043456
    %v85 = vsel %vm83, %v50, 0
    %87 = vmatprep.subr.mxu0 0.0
    %88 = vmatpush1.msra.mxu0 %v85
    %89 = vmatprep.subr.mxu0 0.0
    %90 = vmatpush1.msra.mxu0 0.0
    %91 = vmatprep.subr.mxu0 0.0
    %92 = vmatpush1.msra.mxu0 0.0
    %93 = vmatprep.subr.mxu0 0.0
    %94 = vmatpush1.msra.mxu0 0.0
    %95 = vmatprep.subr.mxu0 0.0
    %96 = vmatpush1.msra.mxu0 0.0
    %97 = vmatprep.subr.mxu0 0.0
    %98 = vmatpush1.msra.mxu0 0.0
    %99 = vmatprep.subr.mxu0 0.0
    %100 = vmatpush1.msra.mxu0 0.0
    %101 = vmatprep.subr.mxu0 0.0
    %102 = vmatpush1.msra.mxu0 0.0
    %103 = vmatprep.subr.mxu0 0.0
    %104 = vmatpush1.msra.mxu0 0.0
    %105 = vmatprep.subr.mxu0 0.0
    %106 = vmatpush1.msra.mxu0 0.0
    %107 = vmatprep.subr.mxu0 0.0
    %108 = vmatpush1.msra.mxu0 0.0
    %109 = vmatprep.subr.mxu0 0.0
    %110 = vmatpush1.msra.mxu0 0.0
    %111 = vmatprep.subr.mxu0 0.0
    %112 = vmatpush1.msra.mxu0 0.0
    %113 = vmatprep.subr.mxu0 0.0
    %114 = vmatpush1.msra.mxu0 0.0
    %115 = vmatprep.subr.mxu0 0.0
    %116 = vmatpush1.msra.mxu0 0.0
    %117 = vmatprep.subr.mxu0 0.0
    %118 = vmatpush1.msra.mxu0 0.0
    %119 = vmatprep.subr.mxu0 0.0
    %120 = vmatpush1.msra.mxu0 0.0
    %121 = vmatprep.subr.mxu0 0.0
    %122 = vmatpush1.msra.mxu0 0.0
    %123 = vmatprep.subr.mxu0 0.0
    %124 = vmatpush1.msra.mxu0 0.0
    %125 = vmatprep.subr.mxu0 0.0
    %126 = vmatpush1.msra.mxu0 0.0
    %127 = vmatprep.subr.mxu0 0.0
    %128 = vmatpush1.msra.mxu0 0.0
    %129 = vmatprep.subr.mxu0 0.0
    %130 = vmatpush1.msra.mxu0 0.0
    %131 = vmatprep.subr.mxu0 0.0
    %132 = vmatpush1.msra.mxu0 0.0
    %133 = vmatprep.subr.mxu0 0.0
    %134 = vmatpush1.msra.mxu0 0.0
    %135 = vmatprep.subr.mxu0 0.0
    %136 = vmatpush1.msra.mxu0 0.0
    %137 = vmatprep.subr.mxu0 0.0
    %138 = vmatpush1.msra.mxu0 0.0
    %139 = vmatprep.subr.mxu0 0.0
    %140 = vmatpush1.msra.mxu0 0.0
    %141 = vmatprep.subr.mxu0 0.0
    %142 = vmatpush1.msra.mxu0 0.0
    %143 = vmatprep.subr.mxu0 0.0
    %144 = vmatpush1.msra.mxu0 0.0
    %145 = vmatprep.subr.mxu0 0.0
    %146 = vmatpush1.msra.mxu0 0.0
    %147 = vmatprep.subr.mxu0 0.0
    %148 = vmatpush1.msra.mxu0 0.0
    %149 = vmatprep.subr.mxu0 0.0
    %150 = vmatpush1.msra.mxu0 0.0
    %151 = vmatprep.mubr.f32.mxu0 0.0
    %152 = vmatmul.mubr.f32.gmra.mrb[0].mxu0 %v60
    %v153 = vpop.f32.mrb[0].mxu0
    %v154 = vadd.f32 %v56, %v153
    %v155 = vpop.f32.mrb[0].mxu0
    %156 = vmatprep.mubr.f32.mxu0 0.0
    %157 = vmatmul.mubr.f32.gmra.mrb[0].mxu0 %v63
    %v158 = vpop.f32.mrb[0].mxu0
    %v159 = vadd.f32 %v56, %v158
    %v160 = vpop.f32.mrb[0].mxu0
    %161 = vmatprep.mubr.f32.mxu0 0.0
    %162 = vmatmul.mubr.f32.gmra.mrb[0].mxu0 %v66
    %v163 = vpop.f32.mrb[0].mxu0
    %v164 = vadd.f32 %v56, %v163
    %v165 = vpop.f32.mrb[0].mxu0
    %166 = vmatprep.mubr.f32.mxu0 0.0
    %167 = vmatmul.mubr.f32.gmra.mrb[0].mxu0 %v69
    %v168 = vpop.f32.mrb[0].mxu0
    %v169 = vadd.f32 %v56, %v168
    %v170 = vpop.f32.mrb[0].mxu0
    %171 = vmatprep.mubr.f32.mxu0 0.0
    %172 = vmatmul.mubr.f32.gmra.mrb[0].mxu0 %v72
    %v173 = vpop.f32.mrb[0].mxu0
    %v174 = vadd.f32 %v56, %v173
    %v175 = vpop.f32.mrb[0].mxu0
    %176 = vmatprep.mubr.f32.mxu0 0.0
    %177 = vmatmul.mubr.f32.gmra.mrb[0].mxu0 %v75
    %v178 = vpop.f32.mrb[0].mxu0
    %v179 = vadd.f32 %v56, %v178
    %v180 = vpop.f32.mrb[0].mxu0
    %181 = vmatprep.mubr.f32.mxu0 0.0
    %182 = vmatmul.mubr.f32.gmra.mrb[0].mxu0 %v78
    %v183 = vpop.f32.mrb[0].mxu0
    %v184 = vadd.f32 %v56, %v183
    %v185 = vpop.f32.mrb[0].mxu0
    %186 = vmatprep.mubr.f32.mxu0 0.0
    %187 = vmatmul.mubr.f32.gmra.mrb[0].mxu0 %v81
    %v188 = vpop.f32.mrb[0].mxu0
    %v189 = vadd.f32 %v56, %v188
    %v190 = vpop.f32.mrb[0].mxu0
    %191 = vdwg.mxu0
    %v192 = vld [vmem:[%s4] sm:$0xff]
    %v193 = vld [vmem:[%s4 + $0x8] sm:$0xff]
    %v194 = vld [vmem:[%s4 + $0x10] sm:$0xff]
    %v195 = vld [vmem:[%s4 + $0x18] sm:$0xff]
    %v196 = vld [vmem:[%s6] sm:$0x1]
    %v197 = vld [vmem:[%s7] sm:$0x1]
    %v198 = vld [vmem:[%s1] sm:$0xff]
    %v199 = vld [vmem:[%s2] sm:$0xff]
    %vm200 = vcmask 261120
    %v202 = vsel %vm200, %v198, 0
    %204 = vmatprep.subr.mxu0 0.0
    %205 = vmatpush1.msra.mxu0 %v192
    %206 = vmatprep.subr.mxu0 0.0
    %207 = vmatpush1.msra.mxu0 %v193
    %208 = vmatprep.subr.mxu0 0.0
    %209 = vmatpush1.msra.mxu0 %v194
    %210 = vmatprep.subr.mxu0 0.0
    %211 = vmatpush1.msra.mxu0 %v195
    %212 = vmatprep.subr.mxu0 0.0
    %213 = vmatpush1.msra.mxu0 0.0
    %214 = vmatprep.subr.mxu0 0.0
    %215 = vmatpush1.msra.mxu0 0.0
    %216 = vmatprep.subr.mxu0 0.0
    %217 = vmatpush1.msra.mxu0 0.0
    %218 = vmatprep.subr.mxu0 0.0
    %219 = vmatpush1.msra.mxu0 0.0
    %220 = vmatprep.subr.mxu0 0.0
    %221 = vmatpush1.msra.mxu0 0.0
    %222 = vmatprep.subr.mxu0 0.0
    %223 = vmatpush1.msra.mxu0 0.0
    %224 = vmatprep.subr.mxu0 0.0
    %225 = vmatpush1.msra.mxu0 0.0
    %226 = vmatprep.subr.mxu0 0.0
    %227 = vmatpush1.msra.mxu0 0.0
    %228 = vmatprep.subr.mxu0 0.0
    %229 = vmatpush1.msra.mxu0 0.0
    %230 = vmatprep.subr.mxu0 0.0
    %231 = vmatpush1.msra.mxu0 0.0
    %232 = vmatprep.subr.mxu0 0.0
    %233 = vmatpush1.msra.mxu0 0.0
    %234 = vmatprep.subr.mxu0 0.0
    %235 = vmatpush1.msra.mxu0 0.0
    %236 = vmatprep.subr.mxu0 0.0
    %237 = vmatpush1.msra.mxu0 0.0
    %238 = vmatprep.subr.mxu0 0.0
    %239 = vmatpush1.msra.mxu0 0.0
    %240 = vmatprep.subr.mxu0 0.0
    %241 = vmatpush1.msra.mxu0 0.0
    %242 = vmatprep.subr.mxu0 0.0
    %243 = vmatpush1.msra.mxu0 0.0
    %244 = vmatprep.subr.mxu0 0.0
    %245 = vmatpush1.msra.mxu0 0.0
    %246 = vmatprep.subr.mxu0 0.0
    %247 = vmatpush1.msra.mxu0 0.0
    %248 = vmatprep.subr.mxu0 0.0
    %249 = vmatpush1.msra.mxu0 0.0
    %250 = vmatprep.subr.mxu0 0.0
    %251 = vmatpush1.msra.mxu0 0.0
    %252 = vmatprep.subr.mxu0 0.0
    %253 = vmatpush1.msra.mxu0 0.0
    %254 = vmatprep.subr.mxu0 0.0
    %255 = vmatpush1.msra.mxu0 0.0
    %256 = vmatprep.subr.mxu0 0.0
    %257 = vmatpush1.msra.mxu0 0.0
    %258 = vmatprep.subr.mxu0 0.0
    %259 = vmatpush1.msra.mxu0 0.0
    %260 = vmatprep.subr.mxu0 0.0
    %261 = vmatpush1.msra.mxu0 0.0
    %262 = vmatprep.subr.mxu0 0.0
    %263 = vmatpush1.msra.mxu0 0.0
    %264 = vmatprep.subr.mxu0 0.0
    %265 = vmatpush1.msra.mxu0 0.0
    %266 = vmatprep.subr.mxu0 0.0
    %267 = vmatpush1.msra.mxu0 0.0
    %268 = vmatprep.mubr.f32.mxu0 0.0
    %269 = vmatmul.mubr.f32.gmra.mrb[0].mxu0 %v202
    %v270 = vpop.f32.mrb[0].mxu0
    %v271 = vadd.f32 0.0, %v270
    %v272 = vpop.f32.mrb[0].mxu0
    %273 = vdwg.mxu0
    %v274 = vadd.f32 %v154, %v271
    %v275 = vtanh.pop %v274
    %v277 = vlaneseq
    %v278 = vshrl.u32 %v277, 7
    %v279 = vsub.s32 0, %v278
    %v280 = vrot.slane %v196, %v279
    %v282 = vmul.f32 %v275, %v280
    %v284 = vlaneseq
    %v285 = vshrl.u32 %v284, 7
    %v286 = vsub.s32 0, %v285
    %v287 = vrot.slane %v197, %v286
    %v289 = vadd.f32 %v282, %v287
    %291 = vrot.lane.b32.xlu0 %v199, 32
    %v292 = vpop.permute.xlu0 %291
    %v294 = vmul.f32 %v289, %v292
    %296 = vrot.lane.b32.xlu0 %v289, 32
    %v297 = vpop.permute.xlu0 %296
    %v299 = vmul.f32 %v289, %v297
    %301 = vrot.lane.b32.xlu0 %v299, 32
    %v302 = vpop.permute.xlu0 %301
    %v304 = vadd.f32 %v294, %v302
    %v305 = vtanh.pop %v304
    %307 = vrot.lane.b32.xlu0 %v305, 32
    %v308 = vpop.permute.xlu0 %307
    %v310 = vmul.f32 %v289, %v308
    %312 = vrot.lane.b32.xlu0 %v310, 64
    %v313 = vpop.permute.xlu0 %312
    %v314 = vsel %vm200, %v313, 0
    %316 = vmatprep.subr.mxu0 0.0
    %317 = vmatpush1.msra.mxu0 %v192
    %318 = vmatprep.subr.mxu0 0.0
    %319 = vmatpush1.msra.mxu0 %v193
    %320 = vmatprep.subr.mxu0 0.0
    %321 = vmatpush1.msra.mxu0 %v194
    %322 = vmatprep.subr.mxu0 0.0
    %323 = vmatpush1.msra.mxu0 %v195
    %324 = vmatprep.subr.mxu0 0.0
    %325 = vmatpush1.msra.mxu0 0.0
    %326 = vmatprep.subr.mxu0 0.0
    %327 = vmatpush1.msra.mxu0 0.0
    %328 = vmatprep.subr.mxu0 0.0
    %329 = vmatpush1.msra.mxu0 0.0
    %330 = vmatprep.subr.mxu0 0.0
    %331 = vmatpush1.msra.mxu0 0.0
    %332 = vmatprep.subr.mxu0 0.0
    %333 = vmatpush1.msra.mxu0 0.0
    %334 = vmatprep.subr.mxu0 0.0
    %335 = vmatpush1.msra.mxu0 0.0
    %336 = vmatprep.subr.mxu0 0.0
    %337 = vmatpush1.msra.mxu0 0.0
    %338 = vmatprep.subr.mxu0 0.0
    %339 = vmatpush1.msra.mxu0 0.0
    %340 = vmatprep.subr.mxu0 0.0
    %341 = vmatpush1.msra.mxu0 0.0
    %342 = vmatprep.subr.mxu0 0.0
    %343 = vmatpush1.msra.mxu0 0.0
    %344 = vmatprep.subr.mxu0 0.0
    %345 = vmatpush1.msra.mxu0 0.0
    %346 = vmatprep.subr.mxu0 0.0
    %347 = vmatpush1.msra.mxu0 0.0
    %348 = vmatprep.subr.mxu0 0.0
    %349 = vmatpush1.msra.mxu0 0.0
    %350 = vmatprep.subr.mxu0 0.0
    %351 = vmatpush1.msra.mxu0 0.0
    %352 = vmatprep.subr.mxu0 0.0
    %353 = vmatpush1.msra.mxu0 0.0
    %354 = vmatprep.subr.mxu0 0.0
    %355 = vmatpush1.msra.mxu0 0.0
    %356 = vmatprep.subr.mxu0 0.0
    %357 = vmatpush1.msra.mxu0 0.0
    %358 = vmatprep.subr.mxu0 0.0
    %359 = vmatpush1.msra.mxu0 0.0
    %360 = vmatprep.subr.mxu0 0.0
    %361 = vmatpush1.msra.mxu0 0.0
    %362 = vmatprep.subr.mxu0 0.0
    %363 = vmatpush1.msra.mxu0 0.0
    %364 = vmatprep.subr.mxu0 0.0
    %365 = vmatpush1.msra.mxu0 0.0
    %366 = vmatprep.subr.mxu0 0.0
    %367 = vmatpush1.msra.mxu0 0.0
    %368 = vmatprep.subr.mxu0 0.0
    %369 = vmatpush1.msra.mxu0 0.0
    %370 = vmatprep.subr.mxu0 0.0
    %371 = vmatpush1.msra.mxu0 0.0
    %372 = vmatprep.subr.mxu0 0.0
    %373 = vmatpush1.msra.mxu0 0.0
    %374 = vmatprep.subr.mxu0 0.0
    %375 = vmatpush1.msra.mxu0 0.0
    %376 = vmatprep.subr.mxu0 0.0
    %377 = vmatpush1.msra.mxu0 0.0
    %378 = vmatprep.subr.mxu0 0.0
    %379 = vmatpush1.msra.mxu0 0.0
    %380 = vmatprep.mubr.f32.mxu0 0.0
    %381 = vmatmul.mubr.f32.gmra.mrb[0].mxu0 %v314
    %v382 = vpop.f32.mrb[0].mxu0
    %v383 = vadd.f32 0.0, %v382
    %v384 = vpop.f32.mrb[0].mxu0
    %385 = vdwg.mxu0
    %v386 = vadd.f32 %v159, %v383
    %v387 = vtanh.pop %v386
    %v388 = vmul.f32 %v387, %v280
    %v389 = vadd.f32 %v388, %v287
    %v390 = vmul.f32 %v389, %v304
    %392 = vrot.lane.b32.xlu0 %v389, 32
    %v393 = vpop.permute.xlu0 %392
    %v395 = vmul.f32 %v389, %v393
    %397 = vrot.lane.b32.xlu0 %v395, 32
    %v398 = vpop.permute.xlu0 %397
    %v400 = vadd.f32 %v390, %v398
    %v401 = vtanh.pop %v400
    %403 = vrot.lane.b32.xlu0 %v401, 32
    %v404 = vpop.permute.xlu0 %403
    %v406 = vmul.f32 %v389, %v404
    %408 = vrot.lane.b32.xlu0 %v406, 64
    %v409 = vpop.permute.xlu0 %408
    %v410 = vsel %vm200, %v409, 0
    %412 = vmatprep.subr.mxu0 0.0
    %413 = vmatpush1.msra.mxu0 %v192
    %414 = vmatprep.subr.mxu0 0.0
    %415 = vmatpush1.msra.mxu0 %v193
    %416 = vmatprep.subr.mxu0 0.0
    %417 = vmatpush1.msra.mxu0 %v194
    %418 = vmatprep.subr.mxu0 0.0
    %419 = vmatpush1.msra.mxu0 %v195
    %420 = vmatprep.subr.mxu0 0.0
    %421 = vmatpush1.msra.mxu0 0.0
    %422 = vmatprep.subr.mxu0 0.0
    %423 = vmatpush1.msra.mxu0 0.0
    %424 = vmatprep.subr.mxu0 0.0
    %425 = vmatpush1.msra.mxu0 0.0
    %426 = vmatprep.subr.mxu0 0.0
    %427 = vmatpush1.msra.mxu0 0.0
    %428 = vmatprep.subr.mxu0 0.0
    %429 = vmatpush1.msra.mxu0 0.0
    %430 = vmatprep.subr.mxu0 0.0
    %431 = vmatpush1.msra.mxu0 0.0
    %432 = vmatprep.subr.mxu0 0.0
    %433 = vmatpush1.msra.mxu0 0.0
    %434 = vmatprep.subr.mxu0 0.0
    %435 = vmatpush1.msra.mxu0 0.0
    %436 = vmatprep.subr.mxu0 0.0
    %437 = vmatpush1.msra.mxu0 0.0
    %438 = vmatprep.subr.mxu0 0.0
    %439 = vmatpush1.msra.mxu0 0.0
    %440 = vmatprep.subr.mxu0 0.0
    %441 = vmatpush1.msra.mxu0 0.0
    %442 = vmatprep.subr.mxu0 0.0
    %443 = vmatpush1.msra.mxu0 0.0
    %444 = vmatprep.subr.mxu0 0.0
    %445 = vmatpush1.msra.mxu0 0.0
    %446 = vmatprep.subr.mxu0 0.0
    %447 = vmatpush1.msra.mxu0 0.0
    %448 = vmatprep.subr.mxu0 0.0
    %449 = vmatpush1.msra.mxu0 0.0
    %450 = vmatprep.subr.mxu0 0.0
    %451 = vmatpush1.msra.mxu0 0.0
    %452 = vmatprep.subr.mxu0 0.0
    %453 = vmatpush1.msra.mxu0 0.0
    %454 = vmatprep.subr.mxu0 0.0
    %455 = vmatpush1.msra.mxu0 0.0
    %456 = vmatprep.subr.mxu0 0.0
    %457 = vmatpush1.msra.mxu0 0.0
    %458 = vmatprep.subr.mxu0 0.0
    %459 = vmatpush1.msra.mxu0 0.0
    %460 = vmatprep.subr.mxu0 0.0
    %461 = vmatpush1.msra.mxu0 0.0
    %462 = vmatprep.subr.mxu0 0.0
    %463 = vmatpush1.msra.mxu0 0.0
    %464 = vmatprep.subr.mxu0 0.0
    %465 = vmatpush1.msra.mxu0 0.0
    %466 = vmatprep.subr.mxu0 0.0
    %467 = vmatpush1.msra.mxu0 0.0
    %468 = vmatprep.subr.mxu0 0.0
    %469 = vmatpush1.msra.mxu0 0.0
    %470 = vmatprep.subr.mxu0 0.0
    %471 = vmatpush1.msra.mxu0 0.0
    %472 = vmatprep.subr.mxu0 0.0
    %473 = vmatpush1.msra.mxu0 0.0
    %474 = vmatprep.subr.mxu0 0.0
    %475 = vmatpush1.msra.mxu0 0.0
    %476 = vmatprep.mubr.f32.mxu0 0.0
    %477 = vmatmul.mubr.f32.gmra.mrb[0].mxu0 %v410
    %v478 = vpop.f32.mrb[0].mxu0
    %v479 = vadd.f32 0.0, %v478
    %v480 = vpop.f32.mrb[0].mxu0
    %481 = vdwg.mxu0
    %v482 = vadd.f32 %v164, %v479
    %v483 = vtanh.pop %v482
    %v484 = vmul.f32 %v483, %v280
    %v485 = vadd.f32 %v484, %v287
    %v486 = vmul.f32 %v485, %v400
    %488 = vrot.lane.b32.xlu0 %v485, 32
    %v489 = vpop.permute.xlu0 %488
    %v491 = vmul.f32 %v485, %v489
    %493 = vrot.lane.b32.xlu0 %v491, 32
    %v494 = vpop.permute.xlu0 %493
    %v496 = vadd.f32 %v486, %v494
    %v497 = vtanh.pop %v496
    %499 = vrot.lane.b32.xlu0 %v497, 32
    %v500 = vpop.permute.xlu0 %499
    %v502 = vmul.f32 %v485, %v500
    %504 = vrot.lane.b32.xlu0 %v502, 64
    %v505 = vpop.permute.xlu0 %504
    %v506 = vsel %vm200, %v505, 0
    %508 = vmatprep.subr.mxu0 0.0
    %509 = vmatpush1.msra.mxu0 %v192
    %510 = vmatprep.subr.mxu0 0.0
    %511 = vmatpush1.msra.mxu0 %v193
    %512 = vmatprep.subr.mxu0 0.0
    %513 = vmatpush1.msra.mxu0 %v194
    %514 = vmatprep.subr.mxu0 0.0
    %515 = vmatpush1.msra.mxu0 %v195
    %516 = vmatprep.subr.mxu0 0.0
    %517 = vmatpush1.msra.mxu0 0.0
    %518 = vmatprep.subr.mxu0 0.0
    %519 = vmatpush1.msra.mxu0 0.0
    %520 = vmatprep.subr.mxu0 0.0
    %521 = vmatpush1.msra.mxu0 0.0
    %522 = vmatprep.subr.mxu0 0.0
    %523 = vmatpush1.msra.mxu0 0.0
    %524 = vmatprep.subr.mxu0 0.0
    %525 = vmatpush1.msra.mxu0 0.0
    %526 = vmatprep.subr.mxu0 0.0
    %527 = vmatpush1.msra.mxu0 0.0
    %528 = vmatprep.subr.mxu0 0.0
    %529 = vmatpush1.msra.mxu0 0.0
    %530 = vmatprep.subr.mxu0 0.0
    %531 = vmatpush1.msra.mxu0 0.0
    %532 = vmatprep.subr.mxu0 0.0
    %533 = vmatpush1.msra.mxu0 0.0
    %534 = vmatprep.subr.mxu0 0.0
    %535 = vmatpush1.msra.mxu0 0.0
    %536 = vmatprep.subr.mxu0 0.0
    %537 = vmatpush1.msra.mxu0 0.0
    %538 = vmatprep.subr.mxu0 0.0
    %539 = vmatpush1.msra.mxu0 0.0
    %540 = vmatprep.subr.mxu0 0.0
    %541 = vmatpush1.msra.mxu0 0.0
    %542 = vmatprep.subr.mxu0 0.0
    %543 = vmatpush1.msra.mxu0 0.0
    %544 = vmatprep.subr.mxu0 0.0
    %545 = vmatpush1.msra.mxu0 0.0
    %546 = vmatprep.subr.mxu0 0.0
    %547 = vmatpush1.msra.mxu0 0.0
    %548 = vmatprep.subr.mxu0 0.0
    %549 = vmatpush1.msra.mxu0 0.0
    %550 = vmatprep.subr.mxu0 0.0
    %551 = vmatpush1.msra.mxu0 0.0
    %552 = vmatprep.subr.mxu0 0.0
    %553 = vmatpush1.msra.mxu0 0.0
    %554 = vmatprep.subr.mxu0 0.0
    %555 = vmatpush1.msra.mxu0 0.0
    %556 = vmatprep.subr.mxu0 0.0
    %557 = vmatpush1.msra.mxu0 0.0
    %558 = vmatprep.subr.mxu0 0.0
    %559 = vmatpush1.msra.mxu0 0.0
    %560 = vmatprep.subr.mxu0 0.0
    %561 = vmatpush1.msra.mxu0 0.0
    %562 = vmatprep.subr.mxu0 0.0
    %563 = vmatpush1.msra.mxu0 0.0
    %564 = vmatprep.subr.mxu0 0.0
    %565 = vmatpush1.msra.mxu0 0.0
    %566 = vmatprep.subr.mxu0 0.0
    %567 = vmatpush1.msra.mxu0 0.0
    %568 = vmatprep.subr.mxu0 0.0
    %569 = vmatpush1.msra.mxu0 0.0
    %570 = vmatprep.subr.mxu0 0.0
    %571 = vmatpush1.msra.mxu0 0.0
    %572 = vmatprep.mubr.f32.mxu0 0.0
    %573 = vmatmul.mubr.f32.gmra.mrb[0].mxu0 %v506
    %v574 = vpop.f32.mrb[0].mxu0
    %v575 = vadd.f32 0.0, %v574
    %v576 = vpop.f32.mrb[0].mxu0
    %577 = vdwg.mxu0
    %v578 = vadd.f32 %v169, %v575
    %v579 = vtanh.pop %v578
    %v580 = vmul.f32 %v579, %v280
    %v581 = vadd.f32 %v580, %v287
    %v582 = vmul.f32 %v581, %v496
    %584 = vrot.lane.b32.xlu0 %v581, 32
    %v585 = vpop.permute.xlu0 %584
    %v587 = vmul.f32 %v581, %v585
    %589 = vrot.lane.b32.xlu0 %v587, 32
    %v590 = vpop.permute.xlu0 %589
    %v592 = vadd.f32 %v582, %v590
    %v593 = vtanh.pop %v592
    %595 = vrot.lane.b32.xlu0 %v593, 32
    %v596 = vpop.permute.xlu0 %595
    %v598 = vmul.f32 %v581, %v596
    %600 = vrot.lane.b32.xlu0 %v598, 64
    %v601 = vpop.permute.xlu0 %600
    %v602 = vsel %vm200, %v601, 0
    %604 = vmatprep.subr.mxu0 0.0
    %605 = vmatpush1.msra.mxu0 %v192
    %606 = vmatprep.subr.mxu0 0.0
    %607 = vmatpush1.msra.mxu0 %v193
    %608 = vmatprep.subr.mxu0 0.0
    %609 = vmatpush1.msra.mxu0 %v194
    %610 = vmatprep.subr.mxu0 0.0
    %611 = vmatpush1.msra.mxu0 %v195
    %612 = vmatprep.subr.mxu0 0.0
    %613 = vmatpush1.msra.mxu0 0.0
    %614 = vmatprep.subr.mxu0 0.0
    %615 = vmatpush1.msra.mxu0 0.0
    %616 = vmatprep.subr.mxu0 0.0
    %617 = vmatpush1.msra.mxu0 0.0
    %618 = vmatprep.subr.mxu0 0.0
    %619 = vmatpush1.msra.mxu0 0.0
    %620 = vmatprep.subr.mxu0 0.0
    %621 = vmatpush1.msra.mxu0 0.0
    %622 = vmatprep.subr.mxu0 0.0
    %623 = vmatpush1.msra.mxu0 0.0
    %624 = vmatprep.subr.mxu0 0.0
    %625 = vmatpush1.msra.mxu0 0.0
    %626 = vmatprep.subr.mxu0 0.0
    %627 = vmatpush1.msra.mxu0 0.0
    %628 = vmatprep.subr.mxu0 0.0
    %629 = vmatpush1.msra.mxu0 0.0
    %630 = vmatprep.subr.mxu0 0.0
    %631 = vmatpush1.msra.mxu0 0.0
    %632 = vmatprep.subr.mxu0 0.0
    %633 = vmatpush1.msra.mxu0 0.0
    %634 = vmatprep.subr.mxu0 0.0
    %635 = vmatpush1.msra.mxu0 0.0
    %636 = vmatprep.subr.mxu0 0.0
    %637 = vmatpush1.msra.mxu0 0.0
    %638 = vmatprep.subr.mxu0 0.0
    %639 = vmatpush1.msra.mxu0 0.0
    %640 = vmatprep.subr.mxu0 0.0
    %641 = vmatpush1.msra.mxu0 0.0
    %642 = vmatprep.subr.mxu0 0.0
    %643 = vmatpush1.msra.mxu0 0.0
    %644 = vmatprep.subr.mxu0 0.0
    %645 = vmatpush1.msra.mxu0 0.0
    %646 = vmatprep.subr.mxu0 0.0
    %647 = vmatpush1.msra.mxu0 0.0
    %648 = vmatprep.subr.mxu0 0.0
    %649 = vmatpush1.msra.mxu0 0.0
    %650 = vmatprep.subr.mxu0 0.0
    %651 = vmatpush1.msra.mxu0 0.0
    %652 = vmatprep.subr.mxu0 0.0
    %653 = vmatpush1.msra.mxu0 0.0
    %654 = vmatprep.subr.mxu0 0.0
    %655 = vmatpush1.msra.mxu0 0.0
    %656 = vmatprep.subr.mxu0 0.0
    %657 = vmatpush1.msra.mxu0 0.0
    %658 = vmatprep.subr.mxu0 0.0
    %659 = vmatpush1.msra.mxu0 0.0
    %660 = vmatprep.subr.mxu0 0.0
    %661 = vmatpush1.msra.mxu0 0.0
    %662 = vmatprep.subr.mxu0 0.0
    %663 = vmatpush1.msra.mxu0 0.0
    %664 = vmatprep.subr.mxu0 0.0
    %665 = vmatpush1.msra.mxu0 0.0
    %666 = vmatprep.subr.mxu0 0.0
    %667 = vmatpush1.msra.mxu0 0.0
    %668 = vmatprep.mubr.f32.mxu0 0.0
    %669 = vmatmul.mubr.f32.gmra.mrb[0].mxu0 %v602
    %v670 = vpop.f32.mrb[0].mxu0
    %v671 = vadd.f32 0.0, %v670
    %v672 = vpop.f32.mrb[0].mxu0
    %673 = vdwg.mxu0
    %v674 = vadd.f32 %v174, %v671
    %v675 = vtanh.pop %v674
    %v676 = vmul.f32 %v675, %v280
    %v677 = vadd.f32 %v676, %v287
    %v678 = vmul.f32 %v677, %v592
    %680 = vrot.lane.b32.xlu0 %v677, 32
    %v681 = vpop.permute.xlu0 %680
    %v683 = vmul.f32 %v677, %v681
    %685 = vrot.lane.b32.xlu0 %v683, 32
    %v686 = vpop.permute.xlu0 %685
    %v688 = vadd.f32 %v678, %v686
    %v689 = vtanh.pop %v688
    %691 = vrot.lane.b32.xlu0 %v689, 32
    %v692 = vpop.permute.xlu0 %691
    %v694 = vmul.f32 %v677, %v692
    %696 = vrot.lane.b32.xlu0 %v694, 64
    %v697 = vpop.permute.xlu0 %696
    %v698 = vsel %vm200, %v697, 0
    %700 = vmatprep.subr.mxu0 0.0
    %701 = vmatpush1.msra.mxu0 %v192
    %702 = vmatprep.subr.mxu0 0.0
    %703 = vmatpush1.msra.mxu0 %v193
    %704 = vmatprep.subr.mxu0 0.0
    %705 = vmatpush1.msra.mxu0 %v194
    %706 = vmatprep.subr.mxu0 0.0
    %707 = vmatpush1.msra.mxu0 %v195
    %708 = vmatprep.subr.mxu0 0.0
    %709 = vmatpush1.msra.mxu0 0.0
    %710 = vmatprep.subr.mxu0 0.0
    %711 = vmatpush1.msra.mxu0 0.0
    %712 = vmatprep.subr.mxu0 0.0
    %713 = vmatpush1.msra.mxu0 0.0
    %714 = vmatprep.subr.mxu0 0.0
    %715 = vmatpush1.msra.mxu0 0.0
    %716 = vmatprep.subr.mxu0 0.0
    %717 = vmatpush1.msra.mxu0 0.0
    %718 = vmatprep.subr.mxu0 0.0
    %719 = vmatpush1.msra.mxu0 0.0
    %720 = vmatprep.subr.mxu0 0.0
    %721 = vmatpush1.msra.mxu0 0.0
    %722 = vmatprep.subr.mxu0 0.0
    %723 = vmatpush1.msra.mxu0 0.0
    %724 = vmatprep.subr.mxu0 0.0
    %725 = vmatpush1.msra.mxu0 0.0
    %726 = vmatprep.subr.mxu0 0.0
    %727 = vmatpush1.msra.mxu0 0.0
    %728 = vmatprep.subr.mxu0 0.0
    %729 = vmatpush1.msra.mxu0 0.0
    %730 = vmatprep.subr.mxu0 0.0
    %731 = vmatpush1.msra.mxu0 0.0
    %732 = vmatprep.subr.mxu0 0.0
    %733 = vmatpush1.msra.mxu0 0.0
    %734 = vmatprep.subr.mxu0 0.0
    %735 = vmatpush1.msra.mxu0 0.0
    %736 = vmatprep.subr.mxu0 0.0
    %737 = vmatpush1.msra.mxu0 0.0
    %738 = vmatprep.subr.mxu0 0.0
    %739 = vmatpush1.msra.mxu0 0.0
    %740 = vmatprep.subr.mxu0 0.0
    %741 = vmatpush1.msra.mxu0 0.0
    %742 = vmatprep.subr.mxu0 0.0
    %743 = vmatpush1.msra.mxu0 0.0
    %744 = vmatprep.subr.mxu0 0.0
    %745 = vmatpush1.msra.mxu0 0.0
    %746 = vmatprep.subr.mxu0 0.0
    %747 = vmatpush1.msra.mxu0 0.0
    %748 = vmatprep.subr.mxu0 0.0
    %749 = vmatpush1.msra.mxu0 0.0
    %750 = vmatprep.subr.mxu0 0.0
    %751 = vmatpush1.msra.mxu0 0.0
    %752 = vmatprep.subr.mxu0 0.0
    %753 = vmatpush1.msra.mxu0 0.0
    %754 = vmatprep.subr.mxu0 0.0
    %755 = vmatpush1.msra.mxu0 0.0
    %756 = vmatprep.subr.mxu0 0.0
    %757 = vmatpush1.msra.mxu0 0.0
    %758 = vmatprep.subr.mxu0 0.0
    %759 = vmatpush1.msra.mxu0 0.0
    %760 = vmatprep.subr.mxu0 0.0
    %761 = vmatpush1.msra.mxu0 0.0
    %762 = vmatprep.subr.mxu0 0.0
    %763 = vmatpush1.msra.mxu0 0.0
    %764 = vmatprep.mubr.f32.mxu0 0.0
    %765 = vmatmul.mubr.f32.gmra.mrb[0].mxu0 %v698
    %v766 = vpop.f32.mrb[0].mxu0
    %v767 = vadd.f32 0.0, %v766
    %v768 = vpop.f32.mrb[0].mxu0
    %769 = vdwg.mxu0
    %v770 = vadd.f32 %v179, %v767
    %v771 = vtanh.pop %v770
    %v772 = vmul.f32 %v771, %v280
    %v773 = vadd.f32 %v772, %v287
    %v774 = vmul.f32 %v773, %v688
    %776 = vrot.lane.b32.xlu0 %v773, 32
    %v777 = vpop.permute.xlu0 %776
    %v779 = vmul.f32 %v773, %v777
    %781 = vrot.lane.b32.xlu0 %v779, 32
    %v782 = vpop.permute.xlu0 %781
    %v784 = vadd.f32 %v774, %v782
    %v785 = vtanh.pop %v784
    %787 = vrot.lane.b32.xlu0 %v785, 32
    %v788 = vpop.permute.xlu0 %787
    %v790 = vmul.f32 %v773, %v788
    %792 = vrot.lane.b32.xlu0 %v790, 64
    %v793 = vpop.permute.xlu0 %792
    %v794 = vsel %vm200, %v793, 0
    %796 = vmatprep.subr.mxu0 0.0
    %797 = vmatpush1.msra.mxu0 %v192
    %798 = vmatprep.subr.mxu0 0.0
    %799 = vmatpush1.msra.mxu0 %v193
    %800 = vmatprep.subr.mxu0 0.0
    %801 = vmatpush1.msra.mxu0 %v194
    %802 = vmatprep.subr.mxu0 0.0
    %803 = vmatpush1.msra.mxu0 %v195
    %804 = vmatprep.subr.mxu0 0.0
    %805 = vmatpush1.msra.mxu0 0.0
    %806 = vmatprep.subr.mxu0 0.0
    %807 = vmatpush1.msra.mxu0 0.0
    %808 = vmatprep.subr.mxu0 0.0
    %809 = vmatpush1.msra.mxu0 0.0
    %810 = vmatprep.subr.mxu0 0.0
    %811 = vmatpush1.msra.mxu0 0.0
    %812 = vmatprep.subr.mxu0 0.0
    %813 = vmatpush1.msra.mxu0 0.0
    %814 = vmatprep.subr.mxu0 0.0
    %815 = vmatpush1.msra.mxu0 0.0
    %816 = vmatprep.subr.mxu0 0.0
    %817 = vmatpush1.msra.mxu0 0.0
    %818 = vmatprep.subr.mxu0 0.0
    %819 = vmatpush1.msra.mxu0 0.0
    %820 = vmatprep.subr.mxu0 0.0
    %821 = vmatpush1.msra.mxu0 0.0
    %822 = vmatprep.subr.mxu0 0.0
    %823 = vmatpush1.msra.mxu0 0.0
    %824 = vmatprep.subr.mxu0 0.0
    %825 = vmatpush1.msra.mxu0 0.0
    %826 = vmatprep.subr.mxu0 0.0
    %827 = vmatpush1.msra.mxu0 0.0
    %828 = vmatprep.subr.mxu0 0.0
    %829 = vmatpush1.msra.mxu0 0.0
    %830 = vmatprep.subr.mxu0 0.0
    %831 = vmatpush1.msra.mxu0 0.0
    %832 = vmatprep.subr.mxu0 0.0
    %833 = vmatpush1.msra.mxu0 0.0
    %834 = vmatprep.subr.mxu0 0.0
    %835 = vmatpush1.msra.mxu0 0.0
    %836 = vmatprep.subr.mxu0 0.0
    %837 = vmatpush1.msra.mxu0 0.0
    %838 = vmatprep.subr.mxu0 0.0
    %839 = vmatpush1.msra.mxu0 0.0
    %840 = vmatprep.subr.mxu0 0.0
    %841 = vmatpush1.msra.mxu0 0.0
    %842 = vmatprep.subr.mxu0 0.0
    %843 = vmatpush1.msra.mxu0 0.0
    %844 = vmatprep.subr.mxu0 0.0
    %845 = vmatpush1.msra.mxu0 0.0
    %846 = vmatprep.subr.mxu0 0.0
    %847 = vmatpush1.msra.mxu0 0.0
    %848 = vmatprep.subr.mxu0 0.0
    %849 = vmatpush1.msra.mxu0 0.0
    %850 = vmatprep.subr.mxu0 0.0
    %851 = vmatpush1.msra.mxu0 0.0
    %852 = vmatprep.subr.mxu0 0.0
    %853 = vmatpush1.msra.mxu0 0.0
    %854 = vmatprep.subr.mxu0 0.0
    %855 = vmatpush1.msra.mxu0 0.0
    %856 = vmatprep.subr.mxu0 0.0
    %857 = vmatpush1.msra.mxu0 0.0
    %858 = vmatprep.subr.mxu0 0.0
    %859 = vmatpush1.msra.mxu0 0.0
    %860 = vmatprep.mubr.f32.mxu0 0.0
    %861 = vmatmul.mubr.f32.gmra.mrb[0].mxu0 %v794
    %v862 = vpop.f32.mrb[0].mxu0
    %v863 = vadd.f32 0.0, %v862
    %v864 = vpop.f32.mrb[0].mxu0
    %865 = vdwg.mxu0
    %v866 = vadd.f32 %v184, %v863
    %v867 = vtanh.pop %v866
    %v868 = vmul.f32 %v867, %v280
    %v869 = vadd.f32 %v868, %v287
    %v870 = vmul.f32 %v869, %v784
    %872 = vrot.lane.b32.xlu0 %v869, 32
    %v873 = vpop.permute.xlu0 %872
    %v875 = vmul.f32 %v869, %v873
    %877 = vrot.lane.b32.xlu0 %v875, 32
    %v878 = vpop.permute.xlu0 %877
    %v880 = vadd.f32 %v870, %v878
    %v881 = vtanh.pop %v880
    %883 = vrot.lane.b32.xlu0 %v881, 32
    %v884 = vpop.permute.xlu0 %883
    %v886 = vmul.f32 %v869, %v884
    %888 = vrot.lane.b32.xlu0 %v886, 64
    %v889 = vpop.permute.xlu0 %888
    %v890 = vsel %vm200, %v889, 0
    %892 = vmatprep.subr.mxu0 0.0
    %893 = vmatpush1.msra.mxu0 %v192
    %894 = vmatprep.subr.mxu0 0.0
    %895 = vmatpush1.msra.mxu0 %v193
    %896 = vmatprep.subr.mxu0 0.0
    %897 = vmatpush1.msra.mxu0 %v194
    %898 = vmatprep.subr.mxu0 0.0
    %899 = vmatpush1.msra.mxu0 %v195
    %900 = vmatprep.subr.mxu0 0.0
    %901 = vmatpush1.msra.mxu0 0.0
    %902 = vmatprep.subr.mxu0 0.0
    %903 = vmatpush1.msra.mxu0 0.0
    %904 = vmatprep.subr.mxu0 0.0
    %905 = vmatpush1.msra.mxu0 0.0
    %906 = vmatprep.subr.mxu0 0.0
    %907 = vmatpush1.msra.mxu0 0.0
    %908 = vmatprep.subr.mxu0 0.0
    %909 = vmatpush1.msra.mxu0 0.0
    %910 = vmatprep.subr.mxu0 0.0
    %911 = vmatpush1.msra.mxu0 0.0
    %912 = vmatprep.subr.mxu0 0.0
    %913 = vmatpush1.msra.mxu0 0.0
    %914 = vmatprep.subr.mxu0 0.0
    %915 = vmatpush1.msra.mxu0 0.0
    %916 = vmatprep.subr.mxu0 0.0
    %917 = vmatpush1.msra.mxu0 0.0
    %918 = vmatprep.subr.mxu0 0.0
    %919 = vmatpush1.msra.mxu0 0.0
    %920 = vmatprep.subr.mxu0 0.0
    %921 = vmatpush1.msra.mxu0 0.0
    %922 = vmatprep.subr.mxu0 0.0
    %923 = vmatpush1.msra.mxu0 0.0
    %924 = vmatprep.subr.mxu0 0.0
    %925 = vmatpush1.msra.mxu0 0.0
    %926 = vmatprep.subr.mxu0 0.0
    %927 = vmatpush1.msra.mxu0 0.0
    %928 = vmatprep.subr.mxu0 0.0
    %929 = vmatpush1.msra.mxu0 0.0
    %930 = vmatprep.subr.mxu0 0.0
    %931 = vmatpush1.msra.mxu0 0.0
    %932 = vmatprep.subr.mxu0 0.0
    %933 = vmatpush1.msra.mxu0 0.0
    %934 = vmatprep.subr.mxu0 0.0
    %935 = vmatpush1.msra.mxu0 0.0
    %936 = vmatprep.subr.mxu0 0.0
    %937 = vmatpush1.msra.mxu0 0.0
    %938 = vmatprep.subr.mxu0 0.0
    %939 = vmatpush1.msra.mxu0 0.0
    %940 = vmatprep.subr.mxu0 0.0
    %941 = vmatpush1.msra.mxu0 0.0
    %942 = vmatprep.subr.mxu0 0.0
    %943 = vmatpush1.msra.mxu0 0.0
    %944 = vmatprep.subr.mxu0 0.0
    %945 = vmatpush1.msra.mxu0 0.0
    %946 = vmatprep.subr.mxu0 0.0
    %947 = vmatpush1.msra.mxu0 0.0
    %948 = vmatprep.subr.mxu0 0.0
    %949 = vmatpush1.msra.mxu0 0.0
    %950 = vmatprep.subr.mxu0 0.0
    %951 = vmatpush1.msra.mxu0 0.0
    %952 = vmatprep.subr.mxu0 0.0
    %953 = vmatpush1.msra.mxu0 0.0
    %954 = vmatprep.subr.mxu0 0.0
    %955 = vmatpush1.msra.mxu0 0.0
    %956 = vmatprep.mubr.f32.mxu0 0.0
    %957 = vmatmul.mubr.f32.gmra.mrb[0].mxu0 %v890
    %v958 = vpop.f32.mrb[0].mxu0
    %v959 = vadd.f32 0.0, %v958
    %v960 = vpop.f32.mrb[0].mxu0
    %961 = vdwg.mxu0
    %v962 = vadd.f32 %v189, %v959
    %v963 = vtanh.pop %v962
    %v964 = vmul.f32 %v963, %v280
    %v965 = vadd.f32 %v964, %v287
    %v966 = vmul.f32 %v965, %v880
    %968 = vrot.lane.b32.xlu0 %v965, 32
    %v969 = vpop.permute.xlu0 %968
    %v971 = vmul.f32 %v965, %v969
    %973 = vrot.lane.b32.xlu0 %v971, 32
    %v974 = vpop.permute.xlu0 %973
    %v976 = vadd.f32 %v966, %v974
    %v977 = vtanh.pop %v976
    %979 = vrot.lane.b32.xlu0 %v977, 32
    %v980 = vpop.permute.xlu0 %979
    %v982 = vmul.f32 %v965, %v980
    %984 = vrot.lane.b32.xlu0 %v982, 64
    %v985 = vpop.permute.xlu0 %984
    %987 = vst.msk [vmem:[#allocation3] sm:$0xff] %vm200, %v985
    %989 = vrot.lane.b32.xlu0 %v976, 96
    %v990 = vpop.permute.xlu0 %989
    %992 = vst.msk [vmem:[#allocation5] sm:$0xff] %vm200, %v990
    %v993 = vld [vmem:[%s8] sm:$0xff]
    %v994 = vld [vmem:[%s8 + $0x8] sm:$0xff]
    %v995 = vld [vmem:[%s8 + $0x10] sm:$0xff]
    %v996 = vld [vmem:[%s8 + $0x18] sm:$0xff]
    %v997 = vld [vmem:[#allocation2] sm:$0x1]
    %v999 = vlaneseq
    %v1000 = vshrl.u32 %v999, 7
    %v1001 = vsub.s32 0, %v1000
    %v1002 = vrot.slane %v997, %v1001
    %v1004 = vsel %vm200, %v985, 0
    %1006 = vmatprep.subr.mxu0 0.0
    %1007 = vmatpush1.msra.mxu0 %v993
    %1008 = vmatprep.subr.mxu0 0.0
    %1009 = vmatpush1.msra.mxu0 %v994
    %1010 = vmatprep.subr.mxu0 0.0
    %1011 = vmatpush1.msra.mxu0 %v995
    %1012 = vmatprep.subr.mxu0 0.0
    %1013 = vmatpush1.msra.mxu0 %v996
    %1014 = vmatprep.subr.mxu0 0.0
    %1015 = vmatpush1.msra.mxu0 0.0
    %1016 = vmatprep.subr.mxu0 0.0
    %1017 = vmatpush1.msra.mxu0 0.0
    %1018 = vmatprep.subr.mxu0 0.0
    %1019 = vmatpush1.msra.mxu0 0.0
    %1020 = vmatprep.subr.mxu0 0.0
    %1021 = vmatpush1.msra.mxu0 0.0
    %1022 = vmatprep.subr.mxu0 0.0
    %1023 = vmatpush1.msra.mxu0 0.0
    %1024 = vmatprep.subr.mxu0 0.0
    %1025 = vmatpush1.msra.mxu0 0.0
    %1026 = vmatprep.subr.mxu0 0.0
    %1027 = vmatpush1.msra.mxu0 0.0
    %1028 = vmatprep.subr.mxu0 0.0
    %1029 = vmatpush1.msra.mxu0 0.0
    %1030 = vmatprep.subr.mxu0 0.0
    %1031 = vmatpush1.msra.mxu0 0.0
    %1032 = vmatprep.subr.mxu0 0.0
    %1033 = vmatpush1.msra.mxu0 0.0
    %1034 = vmatprep.subr.mxu0 0.0
    %1035 = vmatpush1.msra.mxu0 0.0
    %1036 = vmatprep.subr.mxu0 0.0
    %1037 = vmatpush1.msra.mxu0 0.0
    %1038 = vmatprep.subr.mxu0 0.0
    %1039 = vmatpush1.msra.mxu0 0.0
    %1040 = vmatprep.subr.mxu0 0.0
    %1041 = vmatpush1.msra.mxu0 0.0
    %1042 = vmatprep.subr.mxu0 0.0
    %1043 = vmatpush1.msra.mxu0 0.0
    %1044 = vmatprep.subr.mxu0 0.0
    %1045 = vmatpush1.msra.mxu0 0.0
    %1046 = vmatprep.subr.mxu0 0.0
    %1047 = vmatpush1.msra.mxu0 0.0
    %1048 = vmatprep.subr.mxu0 0.0
    %1049 = vmatpush1.msra.mxu0 0.0
    %1050 = vmatprep.subr.mxu0 0.0
    %1051 = vmatpush1.msra.mxu0 0.0
    %1052 = vmatprep.subr.mxu0 0.0
    %1053 = vmatpush1.msra.mxu0 0.0
    %1054 = vmatprep.subr.mxu0 0.0
    %1055 = vmatpush1.msra.mxu0 0.0
    %1056 = vmatprep.subr.mxu0 0.0
    %1057 = vmatpush1.msra.mxu0 0.0
    %1058 = vmatprep.subr.mxu0 0.0
    %1059 = vmatpush1.msra.mxu0 0.0
    %1060 = vmatprep.subr.mxu0 0.0
    %1061 = vmatpush1.msra.mxu0 0.0
    %1062 = vmatprep.subr.mxu0 0.0
    %1063 = vmatpush1.msra.mxu0 0.0
    %1064 = vmatprep.subr.mxu0 0.0
    %1065 = vmatpush1.msra.mxu0 0.0
    %1066 = vmatprep.subr.mxu0 0.0
    %1067 = vmatpush1.msra.mxu0 0.0
    %1068 = vmatprep.subr.mxu0 0.0
    %1069 = vmatpush1.msra.mxu0 0.0
    %1070 = vmatprep.mubr.f32.mxu0 0.0
    %1071 = vmatmul.mubr.f32.gmra.mrb[0].mxu0 %v314
    %v1072 = vpop.f32.mrb[0].mxu0
    %v1073 = vadd.f32 %v1002, %v1072
    %v1074 = vpop.f32.mrb[0].mxu0
    %1075 = vmatprep.mubr.f32.mxu0 0.0
    %1076 = vmatmul.mubr.f32.gmra.mrb[0].mxu0 %v410
    %v1077 = vpop.f32.mrb[0].mxu0
    %v1078 = vadd.f32 %v1002, %v1077
    %v1079 = vpop.f32.mrb[0].mxu0
    %1080 = vmatprep.mubr.f32.mxu0 0.0
    %1081 = vmatmul.mubr.f32.gmra.mrb[0].mxu0 %v506
    %v1082 = vpop.f32.mrb[0].mxu0
    %v1083 = vadd.f32 %v1002, %v1082
    %v1084 = vpop.f32.mrb[0].mxu0
    %1085 = vmatprep.mubr.f32.mxu0 0.0
    %1086 = vmatmul.mubr.f32.gmra.mrb[0].mxu0 %v602
    %v1087 = vpop.f32.mrb[0].mxu0
    %v1088 = vadd.f32 %v1002, %v1087
    %v1089 = vpop.f32.mrb[0].mxu0
    %1090 = vmatprep.mubr.f32.mxu0 0.0
    %1091 = vmatmul.mubr.f32.gmra.mrb[0].mxu0 %v698
    %v1092 = vpop.f32.mrb[0].mxu0
    %v1093 = vadd.f32 %v1002, %v1092
    %v1094 = vpop.f32.mrb[0].mxu0
    %1095 = vmatprep.mubr.f32.mxu0 0.0
    %1096 = vmatmul.mubr.f32.gmra.mrb[0].mxu0 %v794
    %v1097 = vpop.f32.mrb[0].mxu0
    %v1098 = vadd.f32 %v1002, %v1097
    %v1099 = vpop.f32.mrb[0].mxu0
    %1100 = vmatprep.mubr.f32.mxu0 0.0
    %1101 = vmatmul.mubr.f32.gmra.mrb[0].mxu0 %v890
    %v1102 = vpop.f32.mrb[0].mxu0
    %v1103 = vadd.f32 %v1002, %v1102
    %v1104 = vpop.f32.mrb[0].mxu0
    %1105 = vmatprep.mubr.f32.mxu0 0.0
    %1106 = vmatmul.mubr.f32.gmra.mrb[0].mxu0 %v1004
    %v1107 = vpop.f32.mrb[0].mxu0
    %v1108 = vadd.f32 %v1002, %v1107
    %v1109 = vpop.f32.mrb[0].mxu0
    %1110 = vdwg.mxu0
    %vm1111 = vcmask 7168
    %1112 = vst.msk [vmem:[%s10] sm:$0xff] %vm1111, %v1073
    %1113 = vst.msk [vmem:[%s10 + $0x8] sm:$0xff] %vm1111, %v1078
    %1114 = vst.msk [vmem:[%s10 + $0x10] sm:$0xff] %vm1111, %v1083
    %1115 = vst.msk [vmem:[%s10 + $0x18] sm:$0xff] %vm1111, %v1088
    %1116 = vst.msk [vmem:[%s10 + $0x20] sm:$0xff] %vm1111, %v1093
    %1117 = vst.msk [vmem:[%s10 + $0x28] sm:$0xff] %vm1111, %v1098
    %1118 = vst.msk [vmem:[%s10 + $0x30] sm:$0xff] %vm1111, %v1103
    %1119 = vst.msk [vmem:[%s10 + $0x38] sm:$0xff] %vm1111, %v1108
    // Predicated region
    $region42: #{tpu_custom_call.1} parent=1 // pred_check
      _
    $region43: #{tpu_custom_call.1} parent=1 // pred_check_branch
      %1121 = sbr.rel (0) target = $region45
    $region44: #{tpu_custom_call.1} parent=1 // pred_region
      _
    $region45: #{tpu_custom_call.1} parent=1 // pred_fallthru
      _
    // Predicated region
    $region46: #{tpu_custom_call.1} parent=1 // pred_check
      _
    $region47: #{tpu_custom_call.1} parent=1 // pred_check_branch
      %1123 = sbr.rel (0) target = $region49
    $region48: #{tpu_custom_call.1} parent=1 // pred_region
      %s1125 = ssub.s32 128, 128
      %1126 = vsyncadd [#allocation4], %s1125
      %s1128 = sshll.u32 [#allocation3], 4
      %s1129 = int_to_ptr.vmem [resolvable:$true] %s1128
      %1131 = dma.vmem_to_hbm [thread:$0]  %s1129, 128, %s11, [#allocation4]
    $region49: #{tpu_custom_call.1} parent=1 // pred_fallthru
      _
    // Predicated region
    $region50: #{tpu_custom_call.1} parent=1 // pred_check
      _
    $region51: #{tpu_custom_call.1} parent=1 // pred_check_branch
      %1133 = sbr.rel (0) target = $region53
    $region52: #{tpu_custom_call.1} parent=1 // pred_region
      %s1135 = ssub.s32 128, 128
      %1136 = vsyncadd [#allocation6], %s1135
      %s1138 = sshll.u32 [#allocation5], 4
      %s1139 = int_to_ptr.vmem [resolvable:$true] %s1138
      %1141 = dma.vmem_to_hbm [thread:$0]  %s1139, 128, %s12, [#allocation6]
    $region53: #{tpu_custom_call.1} parent=1 // pred_fallthru
      _
    // Predicated region
    $region54: #{tpu_custom_call.1} parent=1 // pred_check
      _
    $region55: #{tpu_custom_call.1} parent=1 // pred_check_branch
      %1143 = sbr.rel (0) target = $region57
    $region56: #{tpu_custom_call.1} parent=1 // pred_region
      _
    $region57: #{tpu_custom_call.1} parent=1 // pred_fallthru
      _
    // Predicated region
    $region58: #{tpu_custom_call.1} parent=1 // pred_check
      _
    $region59: #{tpu_custom_call.1} parent=1 // pred_check_branch
      %1145 = sbr.rel (0) target = $region61
    $region60: #{tpu_custom_call.1} parent=1 // pred_region
      %1146 = dma.done [#allocation4], 128
    $region61: #{tpu_custom_call.1} parent=1 // pred_fallthru
      _
    // Predicated region
    $region62: #{tpu_custom_call.1} parent=1 // pred_check
      _
    $region63: #{tpu_custom_call.1} parent=1 // pred_check_branch
      %1148 = sbr.rel (0) target = $region65
    $region64: #{tpu_custom_call.1} parent=1 // pred_region
      %1149 = dma.done [#allocation6], 128
    $region65: #{tpu_custom_call.1} parent=1 // pred_fallthru
      _
    %1150 = vsyncpa [#allocation4], 1
    %1151 = vsyncpa [#allocation6], 1

</llo_original>
